<compile_context>
chip_gen: v7x
topology: tpu7x:2x2x1
jax: 0.10.0
libtpu: 0.0.40
codegen_flags: <defaults>
</compile_context>

<pallas_src>
import jax
import jax.numpy as jnp
from jax.experimental import pallas as pl
from jax.experimental.pallas import tpu as pltpu

LANE = 128


def _round_up(x, m):
    return (x + m - 1) // m * m


# ----------------------------------------------------------------------------
# Pallas kernel: fused  y = relu(x @ w1 + b1) @ w2 + b2   on one row tile
# ----------------------------------------------------------------------------
def fused_mlp_kernel(x_ref, w1_ref, b1_ref, w2_ref, b2_ref, o_ref):
    # (tm, d_in_p) @ (d_in_p, mid_p) -> f32 accumulation on the MXU
    h = jnp.dot(x_ref[...], w1_ref[...], preferred_element_type=jnp.float32)
    h = jnp.maximum(h + b1_ref[...], 0.0)
    # second matmul: cast activations back to the streaming dtype (bf16)
    y = jnp.dot(h.astype(w2_ref.dtype), w2_ref[...],
                preferred_element_type=jnp.float32)
    o_ref[...] = (y + b2_ref[...]).astype(o_ref.dtype)


def pallas_mlp(x, w1_p, b1_p, w2_p, b2_p, *, row_tile=1024):
    """x:(N, d_in) -> (N, d_out) through Linear/ReLU/Linear, fully fused.

    w1_p/b1_p/w2_p/b2_p are the pre-padded kernel-ready parameters produced by
    prepare_node_classy_params (padded once at init, not per call).
    """
    n, d_in = x.shape
    d_in_p, mid_p = w1_p.shape
    d_out = w2_p.shape[1]

    # Sublane granularity: 16 rows for 16-bit streaming dtypes, else 8.
    sub = 16 if jnp.dtype(w1_p.dtype).itemsize < 4 else 8
    assert row_tile % sub == 0

    # Large row tile to amortize the ~0.35us per-grid-step overhead; shrink to
    # the (sublane-rounded) problem size when N is small.
    tm = min(row_tile, _round_up(max(n, sub), sub))
    n_p = _round_up(n, tm)

    # Cast activations to the streaming dtype (bf16) and pad only if needed
    # (d_in is usually already a multiple of 128; only tail rows get padded).
    if x.dtype != w1_p.dtype:
        x = x.astype(w1_p.dtype)
    if (n_p, d_in_p) != (n, d_in):
        x = jnp.pad(x, ((0, n_p - n), (0, d_in_p - d_in)))

    grid = (n_p // tm,)
    out = pl.pallas_call(
        fused_mlp_kernel,
        out_shape=jax.ShapeDtypeStruct((n_p, d_out), jnp.float32),
        grid_spec=pltpu.PrefetchScalarGridSpec(
            num_scalar_prefetch=0,
            grid=grid,
            in_specs=[
                pl.BlockSpec((tm, d_in_p), lambda i: (i, 0)),      # x rows
                pl.BlockSpec((d_in_p, mid_p), lambda i: (0, 0)),   # w1 (resident)
                pl.BlockSpec((1, mid_p), lambda i: (0, 0)),        # b1
                pl.BlockSpec((mid_p, d_out), lambda i: (0, 0)),    # w2 (resident)
                pl.BlockSpec((1, d_out), lambda i: (0, 0)),        # b2
            ],
            # (tm, 2) is legal: last dim equals the full array dim.  A few
            # masked stores per tile beat writing a 128-lane-padded slab.
            out_specs=pl.BlockSpec((tm, d_out), lambda i: (i, 0)),
        ),
        compiler_params=pltpu.CompilerParams(
            dimension_semantics=("parallel",)),   # megacore: shard row tiles
    )(x, w1_p, b1_p, w2_p, b2_p)

    return out if n_p == n else out[:n]


# ----------------------------------------------------------------------------
# NodeClassy parameters
# ----------------------------------------------------------------------------
def init_node_classy_params(key, feat_dim):
    """PyTorch nn.Linear-style uniform init; weights stored (in, out), f32."""
    mid = feat_dim // 8
    k1, k2, k3, k4 = jax.random.split(key, 4)
    bound1 = 1.0 / float(feat_dim) ** 0.5
    bound2 = 1.0 / float(mid) ** 0.5
    return dict(
        w1=jax.random.uniform(k1, (feat_dim, mid), jnp.float32, -bound1, bound1),
        b1=jax.random.uniform(k2, (mid,), jnp.float32, -bound1, bound1),
        w2=jax.random.uniform(k3, (mid, 2), jnp.float32, -bound2, bound2),
        b2=jax.random.uniform(k4, (2,), jnp.float32, -bound2, bound2),
    )


def prepare_node_classy_params(raw, compute_dtype=jnp.bfloat16):
    """Pad / cast the parameters ONCE into the kernel-ready layout.

    Zero-padding is exact: padded hidden units see zero weights and zero bias
    (relu(0)=0) and their w2 rows are zero, so they contribute nothing.
    Weights are streamed in `compute_dtype` (bf16 by default, f32 accumulate
    on the MXU); biases stay f32 since they are added to the f32 accumulator.
    """
    feat_dim, mid = raw["w1"].shape
    d_out = raw["w2"].shape[1]
    d_in_p = _round_up(max(feat_dim, LANE), LANE)
    mid_p = _round_up(max(mid, LANE), LANE)
    w1_p = (jnp.zeros((d_in_p, mid_p), compute_dtype)
            .at[:feat_dim, :mid].set(raw["w1"].astype(compute_dtype)))
    b1_p = jnp.zeros((1, mid_p), jnp.float32).at[0, :mid].set(raw["b1"])
    w2_p = (jnp.zeros((mid_p, d_out), compute_dtype)
            .at[:mid, :].set(raw["w2"].astype(compute_dtype)))
    b2_p = raw["b2"].reshape(1, d_out).astype(jnp.float32)
    return dict(w1=w1_p, b1=b1_p, w2=w2_p, b2=b2_p)


# ----------------------------------------------------------------------------
# NodeClassy forward
# ----------------------------------------------------------------------------
def node_classy_forward(params, tid2embeddings, tid2label, batch_size):
    """Mirrors NodeClassy.forward: returns (output (N,2), labels (N,), tids).

    `params` are the prepared (padded, compute-dtype) parameters.
    """
    tids = list(tid2embeddings.keys())
    cdt = params["w1"].dtype
    # Cast each piece before concatenation so the bf16 cast fuses with the
    # concat (single materialization of the (N, feat_dim) activation slab).
    embeddings = jnp.concatenate(
        [jnp.squeeze(tid2embeddings[t], axis=0).astype(cdt) for t in tids], axis=0)
    labels = jnp.concatenate([tid2label[t] for t in tids]).astype(jnp.int32)

    # The PyTorch while-loop applies the classifier in `batch_size` chunks and
    # concatenates; the MLP is row-wise independent, so a single fused,
    # row-tiled pass over all N rows is numerically equivalent.
    del batch_size
    output = pallas_mlp(embeddings, params["w1"], params["b1"],
                        params["w2"], params["b2"])
    return output, labels, tids


# ----------------------------------------------------------------------------
if __name__ == "__main__":
    feat_dim = 256          # classifier: 256 -> 32 -> 2
    batch_size = 8

    key = jax.random.PRNGKey(0)
    k_param, k_data = jax.random.split(key)
    raw_params = init_node_classy_params(k_param, feat_dim)
    params = prepare_node_classy_params(raw_params)   # pad/cast once

    # Deterministic fake "tid2embeddings" / "tid2label" dicts.
    counts = [5, 7, 4]
    tid_names = ["t0", "t1", "t2"]
    data_keys = jax.random.split(k_data, 2 * len(counts))
    tid2embeddings = {}
    tid2label = {}
    for i, (tid, n) in enumerate(zip(tid_names, counts)):
        tid2embeddings[tid] = jax.random.normal(
            data_keys[2 * i], (1, n, feat_dim), jnp.float32)
        tid2label[tid] = jax.random.randint(
            data_keys[2 * i + 1], (n,), 0, 2, jnp.int32)

    output, labels, tids = node_classy_forward(
        params, tid2embeddings, tid2label, batch_size)
    output = jax.block_until_ready(output)
    labels = jax.block_until_ready(labels)

    n_total = sum(counts)
    assert output.shape == (n_total, 2)
    assert output.dtype == jnp.float32
    assert labels.shape == (n_total,)
    assert tids == tid_names

    # Cross-check against a pure-JAX f32 reference of the same forward pass.
    # Activations/weights are streamed in bf16 (f32 accumulation), so the
    # tolerance is bf16-appropriate.
    emb = jnp.concatenate(
        [jnp.squeeze(tid2embeddings[t], axis=0) for t in tid_names], axis=0)
    ref = (jnp.maximum(emb @ raw_params["w1"] + raw_params["b1"], 0.0)
           @ raw_params["w2"] + raw_params["b2"])
    assert jnp.allclose(output, ref, atol=5e-2, rtol=5e-2), (
        float(jnp.max(jnp.abs(output - ref))))

    # Reference labels check.
    ref_labels = jnp.concatenate([tid2label[t] for t in tid_names])
    assert jnp.array_equal(labels, ref_labels)

    print("KERNEL_OK")
</pallas_src>

<mosaic_0001>
module attributes {stable_mosaic.version = 11 : i64} {
  func.func @fused_mlp_kernel(%arg0: i32, %arg1: memref<16x256xbf16, #tpu.memory_space<vmem>>, %arg2: memref<256x128xbf16, #tpu.memory_space<vmem>>, %arg3: memref<1x128xf32, #tpu.memory_space<vmem>>, %arg4: memref<128x2xbf16, #tpu.memory_space<vmem>>, %arg5: memref<1x2xf32, #tpu.memory_space<vmem>>, %arg6: memref<16x2xf32, #tpu.memory_space<vmem>>) attributes {dimension_semantics = [#tpu.dimension_semantics<parallel>], iteration_bounds = array<i64: 1>, scalar_prefetch = 0 : i64, scratch_operands = 0 : i64, tpu.core_type = #tpu.core_type<tc>, window_params = [{transform_indices = @transform_0, window_bounds = array<i64: 16, 256>}, {pipeline_mode = #tpu.pipeline_mode<synchronous>, transform_indices = @transform_1, window_bounds = array<i64: 256, 128>}, {pipeline_mode = #tpu.pipeline_mode<synchronous>, transform_indices = @transform_2, window_bounds = array<i64: 1, 128>}, {pipeline_mode = #tpu.pipeline_mode<synchronous>, transform_indices = @transform_3, window_bounds = array<i64: 128, 2>}, {pipeline_mode = #tpu.pipeline_mode<synchronous>, transform_indices = @transform_4, window_bounds = array<i64: 1, 2>}, {transform_indices = @transform_5, window_bounds = array<i64: 16, 2>}]} {
    %c0 = arith.constant 0 : index
    %c0_0 = arith.constant 0 : index
    %0 = vector.load %arg1[%c0, %c0_0] : memref<16x256xbf16, #tpu.memory_space<vmem>>, vector<16x256xbf16>
    %c0_1 = arith.constant 0 : index
    %c0_2 = arith.constant 0 : index
    %1 = vector.load %arg2[%c0_1, %c0_2] : memref<256x128xbf16, #tpu.memory_space<vmem>>, vector<256x128xbf16>
    %cst = arith.constant dense<0.000000e+00> : vector<16x128xf32>
    %2 = tpu.matmul %0, %1, %cst {dimension_numbers = #tpu.dot_dimension_numbers<[1], [0], [0], [1], [0, 0, 1, 1], [], []>} : vector<16x256xbf16>, vector<256x128xbf16>, vector<16x128xf32> -> vector<16x128xf32>
    %c0_3 = arith.constant 0 : index
    %c0_4 = arith.constant 0 : index
    %3 = vector.load %arg3[%c0_3, %c0_4] : memref<1x128xf32, #tpu.memory_space<vmem>>, vector<1x128xf32>
    %4 = vector.broadcast %3 : vector<1x128xf32> to vector<16x128xf32>
    %5 = arith.addf %2, %4 : vector<16x128xf32>
    %cst_5 = arith.constant 0.000000e+00 : f32
    %6 = vector.broadcast %cst_5 : f32 to vector<16x128xf32>
    %7 = arith.maximumf %5, %6 : vector<16x128xf32>
    %8 = arith.truncf %7 : vector<16x128xf32> to vector<16x128xbf16>
    %c0_6 = arith.constant 0 : index
    %c0_7 = arith.constant 0 : index
    %9 = vector.load %arg4[%c0_6, %c0_7] : memref<128x2xbf16, #tpu.memory_space<vmem>>, vector<128x2xbf16>
    %cst_8 = arith.constant dense<0.000000e+00> : vector<16x2xf32>
    %10 = tpu.matmul %8, %9, %cst_8 {dimension_numbers = #tpu.dot_dimension_numbers<[1], [0], [0], [1], [0, 0, 1, 1], [], []>} : vector<16x128xbf16>, vector<128x2xbf16>, vector<16x2xf32> -> vector<16x2xf32>
    %c0_9 = arith.constant 0 : index
    %c0_10 = arith.constant 0 : index
    %11 = vector.load %arg5[%c0_9, %c0_10] : memref<1x2xf32, #tpu.memory_space<vmem>>, vector<1x2xf32>
    %12 = vector.broadcast %11 : vector<1x2xf32> to vector<16x2xf32>
    %13 = arith.addf %10, %12 : vector<16x2xf32>
    %c0_11 = arith.constant 0 : index
    %c0_12 = arith.constant 0 : index
    %14 = vector.load %arg6[%c0_11, %c0_12] : memref<16x2xf32, #tpu.memory_space<vmem>>, vector<16x2xf32>
    tpu.vector_store %arg6[%c0_11, %c0_12], %13 {strides = array<i32>} : memref<16x2xf32, #tpu.memory_space<vmem>>, vector<16x2xf32>,
    return
  }
  func.func @transform_0(%arg0: i32) -> (i32, i32) {
    %c0_i32 = arith.constant 0 : i32
    %c0_i32_0 = arith.constant 0 : i32
    return %arg0, %c0_i32 : i32, i32
  }
  func.func @transform_1(%arg0: i32) -> (i32, i32) {
    %c0_i32 = arith.constant 0 : i32
    %c0_i32_0 = arith.constant 0 : i32
    %c0_i32_1 = arith.constant 0 : i32
    return %c0_i32, %c0_i32_0 : i32, i32
  }
  func.func @transform_2(%arg0: i32) -> (i32, i32) {
    %c0_i32 = arith.constant 0 : i32
    %c0_i32_0 = arith.constant 0 : i32
    %c0_i32_1 = arith.constant 0 : i32
    return %c0_i32, %c0_i32_0 : i32, i32
  }
  func.func @transform_3(%arg0: i32) -> (i32, i32) {
    %c0_i32 = arith.constant 0 : i32
    %c0_i32_0 = arith.constant 0 : i32
    %c0_i32_1 = arith.constant 0 : i32
    return %c0_i32, %c0_i32_0 : i32, i32
  }
  func.func @transform_4(%arg0: i32) -> (i32, i32) {
    %c0_i32 = arith.constant 0 : i32
    %c0_i32_0 = arith.constant 0 : i32
    %c0_i32_1 = arith.constant 0 : i32
    return %c0_i32, %c0_i32_0 : i32, i32
  }
  func.func @transform_5(%arg0: i32) -> (i32, i32) {
    %c0_i32 = arith.constant 0 : i32
    %c0_i32_0 = arith.constant 0 : i32
    return %arg0, %c0_i32 : i32, i32
  }
}

</mosaic_0001>

<llo_original>
// kernel: tpu_custom_call.1
$region0: #{tpu_custom_call.1}
  #allocation0 [shape = 'u32[]', space=smem, size = 0x4, offset = 0x4, fixed_abs, tag = 'smem constant byte address 0x4 - core index']
  #allocation1 [shape = 'u32[144,128]{1,0:T(1,128)}', space=vmem, size = 0x12000, scoped, tag = 'internal scratch']
  %s0 = inlined_call_operand.vmem [shape: bf16[16,256], index: 0, kind: input, shape index: {}]
  %s1 = inlined_call_operand.hbm [shape: bf16[256,128], index: 1, kind: input, shape index: {}]
  %s2 = inlined_call_operand.vmem [shape: f32[1,128], index: 2, kind: input, shape index: {}]
  %s3 = inlined_call_operand.vmem [shape: bf16[128,2], index: 3, kind: input, shape index: {}]
  %s4 = inlined_call_operand.vmem [shape: f32[1,2], index: 4, kind: input, shape index: {}]
  %s5 = inlined_call_operand.vmem [shape: f32[16,2], index: 5, kind: output, shape index: {}]
  %s6 = sld [smem:[#allocation0]]
  $region34: #{tpu_custom_call.1} parent=0
    _
  %s8 = ssub.s32 1, %s6
  %s9 = scalar_select 0, %s8, %s6
  $region1: #{tpu_custom_call.1} parent=0
    #allocation2 [shape = 'u8[65536]{0}', space=vmem, size = 0x10000, scoped, tag = 'input window, operand 1, single buffered']
    #allocation3 [shape = 's32[1]{0}', space=sflag, size = 0x4, scoped, tag = 'scoped memory for tpu_custom_call.1']
    %10 = vsyncpa [#allocation3], 0
    // Predicated region
    $region2: #{tpu_custom_call.1} parent=1 // pred_check
      _
    $region3: #{tpu_custom_call.1} parent=1 // pred_check_branch
      %12 = sbr.rel (0) target = $region5
    $region4: #{tpu_custom_call.1} parent=1 // pred_region
      _
    $region5: #{tpu_custom_call.1} parent=1 // pred_fallthru
      _
    // Predicated region
    $region6: #{tpu_custom_call.1} parent=1 // pred_check
      _
    $region7: #{tpu_custom_call.1} parent=1 // pred_check_branch
      %14 = sbr.rel (0) target = $region9
    $region8: #{tpu_custom_call.1} parent=1 // pred_region
      %s16 = ssub.s32 2048, 2048
      %17 = vsyncadd [#allocation3], %s16
      %s18 = sshll.u32 [#allocation2], 4
      %s19 = int_to_ptr.vmem [resolvable:$true] %s18
      %24 = dma.hbm_to_vmem [thread:$0]  %s1, 2048, %s19, [#allocation3], 64, 64, 4
    $region9: #{tpu_custom_call.1} parent=1 // pred_fallthru
      _
    // Predicated region
    $region10: #{tpu_custom_call.1} parent=1 // pred_check
      _
    $region11: #{tpu_custom_call.1} parent=1 // pred_check_branch
      %26 = sbr.rel (0) target = $region13
    $region12: #{tpu_custom_call.1} parent=1 // pred_region
      _
    $region13: #{tpu_custom_call.1} parent=1 // pred_fallthru
      _
    // Predicated region
    $region14: #{tpu_custom_call.1} parent=1 // pred_check
      _
    $region15: #{tpu_custom_call.1} parent=1 // pred_check_branch
      %28 = sbr.rel (0) target = $region17
    $region16: #{tpu_custom_call.1} parent=1 // pred_region
      _
    $region17: #{tpu_custom_call.1} parent=1 // pred_fallthru
      _
    // Predicated region
    $region18: #{tpu_custom_call.1} parent=1 // pred_check
      _
    $region19: #{tpu_custom_call.1} parent=1 // pred_check_branch
      %30 = sbr.rel (0) target = $region21
    $region20: #{tpu_custom_call.1} parent=1 // pred_region
      _
    $region21: #{tpu_custom_call.1} parent=1 // pred_fallthru
      _
    // Predicated region
    $region22: #{tpu_custom_call.1} parent=1 // pred_check
      _
    $region23: #{tpu_custom_call.1} parent=1 // pred_check_branch
      %32 = sbr.rel (0) target = $region25
    $region24: #{tpu_custom_call.1} parent=1 // pred_region
      %33 = dma.done [#allocation3], 2048
    $region25: #{tpu_custom_call.1} parent=1 // pred_fallthru
      _
    %v35 = vld [vmem:[%s0] sm:$0xff]
    %v36 = vld [vmem:[%s0 + $0x8] sm:$0xff]
    %v37 = vld [vmem:[#allocation2] sm:$0xf]
    %v38 = vld [vmem:[#allocation2 + $0x4] sm:$0xf]
    %v39 = vld [vmem:[#allocation2 + $0x8] sm:$0xf]
    %v40 = vld [vmem:[#allocation2 + $0xc] sm:$0xf]
    %v41 = vld [vmem:[#allocation2 + $0x10] sm:$0xf]
    %v42 = vld [vmem:[#allocation2 + $0x14] sm:$0xf]
    %v43 = vld [vmem:[#allocation2 + $0x18] sm:$0xf]
    %v44 = vld [vmem:[#allocation2 + $0x1c] sm:$0xf]
    %v45 = vld [vmem:[#allocation2 + $0x20] sm:$0xf]
    %v46 = vld [vmem:[#allocation2 + $0x24] sm:$0xf]
    %v47 = vld [vmem:[#allocation2 + $0x28] sm:$0xf]
    %v48 = vld [vmem:[#allocation2 + $0x2c] sm:$0xf]
    %v49 = vld [vmem:[#allocation2 + $0x30] sm:$0xf]
    %v50 = vld [vmem:[#allocation2 + $0x34] sm:$0xf]
    %v51 = vld [vmem:[#allocation2 + $0x38] sm:$0xf]
    %v52 = vld [vmem:[#allocation2 + $0x3c] sm:$0xf]
    %v53 = vld [vmem:[#allocation2 + $0x40] sm:$0xf]
    %v54 = vld [vmem:[#allocation2 + $0x44] sm:$0xf]
    %v55 = vld [vmem:[#allocation2 + $0x48] sm:$0xf]
    %v56 = vld [vmem:[#allocation2 + $0x4c] sm:$0xf]
    %v57 = vld [vmem:[#allocation2 + $0x50] sm:$0xf]
    %v58 = vld [vmem:[#allocation2 + $0x54] sm:$0xf]
    %v59 = vld [vmem:[#allocation2 + $0x58] sm:$0xf]
    %v60 = vld [vmem:[#allocation2 + $0x5c] sm:$0xf]
    %v61 = vld [vmem:[#allocation2 + $0x60] sm:$0xf]
    %v62 = vld [vmem:[#allocation2 + $0x64] sm:$0xf]
    %v63 = vld [vmem:[#allocation2 + $0x68] sm:$0xf]
    %v64 = vld [vmem:[#allocation2 + $0x6c] sm:$0xf]
    %v65 = vld [vmem:[#allocation2 + $0x70] sm:$0xf]
    %v66 = vld [vmem:[#allocation2 + $0x74] sm:$0xf]
    %v67 = vld [vmem:[#allocation2 + $0x78] sm:$0xf]
    %v68 = vld [vmem:[#allocation2 + $0x7c] sm:$0xf]
    %v69 = vld [vmem:[%s2] sm:$0x1]
    %v71 = vlaneseq
    %v72 = vshrl.u32 %v71, 7
    %v73 = vsub.s32 0, %v72
    %v74 = vrot.slane %v69, %v73
    %v78 = vunpack.c.l.b16 %v35
    %v79 = vunpack.c.h.b16 %v35
    %v80 = vunpack.c.l.b16 %v36
    %v81 = vunpack.c.h.b16 %v36
    %v82 = vpack.c.b16 %v80, %v78
    %v83 = vpack.c.b16 %v81, %v79
    %v118 = vunpack.c.l.b16 %v37
    %v119 = vunpack.c.l.b16 %v38
    %v120 = vunpack.c.l.b16 %v39
    %v121 = vunpack.c.l.b16 %v40
    %v122 = vunpack.c.l.b16 %v41
    %v123 = vunpack.c.l.b16 %v42
    %v124 = vunpack.c.l.b16 %v43
    %v125 = vunpack.c.l.b16 %v44
    %v126 = vunpack.c.l.b16 %v45
    %v127 = vunpack.c.l.b16 %v46
    %v128 = vunpack.c.l.b16 %v47
    %v129 = vunpack.c.l.b16 %v48
    %v130 = vunpack.c.l.b16 %v49
    %v131 = vunpack.c.l.b16 %v50
    %v132 = vunpack.c.l.b16 %v51
    %v133 = vunpack.c.l.b16 %v52
    %v134 = vunpack.c.l.b16 %v53
    %v135 = vunpack.c.l.b16 %v54
    %v136 = vunpack.c.l.b16 %v55
    %v137 = vunpack.c.l.b16 %v56
    %v138 = vunpack.c.l.b16 %v57
    %v139 = vunpack.c.l.b16 %v58
    %v140 = vunpack.c.l.b16 %v59
    %v141 = vunpack.c.l.b16 %v60
    %v142 = vunpack.c.l.b16 %v61
    %v143 = vunpack.c.l.b16 %v62
    %v144 = vunpack.c.l.b16 %v63
    %v145 = vunpack.c.l.b16 %v64
    %v146 = vunpack.c.l.b16 %v65
    %v147 = vunpack.c.l.b16 %v66
    %v148 = vunpack.c.l.b16 %v67
    %v149 = vunpack.c.l.b16 %v68
    %v150 = vpack.c.b16 %v119, %v118
    %v151 = vpack.c.b16 %v121, %v120
    %v152 = vpack.c.b16 %v123, %v122
    %v153 = vpack.c.b16 %v125, %v124
    %v154 = vpack.c.b16 %v127, %v126
    %v155 = vpack.c.b16 %v129, %v128
    %v156 = vpack.c.b16 %v131, %v130
    %v157 = vpack.c.b16 %v133, %v132
    %v158 = vpack.c.b16 %v135, %v134
    %v159 = vpack.c.b16 %v137, %v136
    %v160 = vpack.c.b16 %v139, %v138
    %v161 = vpack.c.b16 %v141, %v140
    %v162 = vpack.c.b16 %v143, %v142
    %v163 = vpack.c.b16 %v145, %v144
    %v164 = vpack.c.b16 %v147, %v146
    %v165 = vpack.c.b16 %v149, %v148
    %182 = vmatprep.subr.bf16.mxu0 0
    %183 = vmatpush1.bf16.msra.mxu0 %v150
    %184 = vmatprep.subr.bf16.mxu0 0
    %185 = vmatpush1.bf16.msra.mxu0 %v151
    %186 = vmatprep.subr.bf16.mxu0 0
    %187 = vmatpush1.bf16.msra.mxu0 %v152
    %188 = vmatprep.subr.bf16.mxu0 0
    %189 = vmatpush1.bf16.msra.mxu0 %v153
    %190 = vmatprep.subr.bf16.mxu0 0
    %191 = vmatpush1.bf16.msra.mxu0 %v154
    %192 = vmatprep.subr.bf16.mxu0 0
    %193 = vmatpush1.bf16.msra.mxu0 %v155
    %194 = vmatprep.subr.bf16.mxu0 0
    %195 = vmatpush1.bf16.msra.mxu0 %v156
    %196 = vmatprep.subr.bf16.mxu0 0
    %197 = vmatpush1.bf16.msra.mxu0 %v157
    %198 = vmatprep.subr.bf16.mxu0 0
    %199 = vmatpush1.bf16.msra.mxu0 %v158
    %200 = vmatprep.subr.bf16.mxu0 0
    %201 = vmatpush1.bf16.msra.mxu0 %v159
    %202 = vmatprep.subr.bf16.mxu0 0
    %203 = vmatpush1.bf16.msra.mxu0 %v160
    %204 = vmatprep.subr.bf16.mxu0 0
    %205 = vmatpush1.bf16.msra.mxu0 %v161
    %206 = vmatprep.subr.bf16.mxu0 0
    %207 = vmatpush1.bf16.msra.mxu0 %v162
    %208 = vmatprep.subr.bf16.mxu0 0
    %209 = vmatpush1.bf16.msra.mxu0 %v163
    %210 = vmatprep.subr.bf16.mxu0 0
    %211 = vmatpush1.bf16.msra.mxu0 %v164
    %212 = vmatprep.subr.bf16.mxu0 0
    %213 = vmatpush1.bf16.msra.mxu0 %v165
    %214 = vmatprep.mubr.bf16.mxu0 %v83
    %215 = vmatmul.mubr.bf16.gmra.mrb[0].mxu0 %v82
    %v216 = vpop.f32.mrb[0].mxu0
    %v217 = vadd.f32 %v74, %v216
    %v218 = vpop.f32.mrb[0].mxu0
    %v219 = vpop.f32.mrb[0].mxu0
    %v220 = vadd.f32 %v74, %v219
    %v221 = vpop.f32.mrb[0].mxu0
    %222 = vdwg.mxu0
    %v223 = vmax.f32 %v217, 0.0
    %v224 = vmax.f32 %v220, 0.0
    %v225 = vpack.c.bf16 %v224, %v223
    %v226 = vld [vmem:[%s3] sm:$0xf]
    %v227 = vld [vmem:[%s3 + $0x4] sm:$0xf]
    %v228 = vld [vmem:[%s3 + $0x8] sm:$0xf]
    %v229 = vld [vmem:[%s3 + $0xc] sm:$0xf]
    %v230 = vld [vmem:[%s3 + $0x10] sm:$0xf]
    %v231 = vld [vmem:[%s3 + $0x14] sm:$0xf]
    %v232 = vld [vmem:[%s3 + $0x18] sm:$0xf]
    %v233 = vld [vmem:[%s3 + $0x1c] sm:$0xf]
    %v234 = vld [vmem:[%s3 + $0x20] sm:$0xf]
    %v235 = vld [vmem:[%s3 + $0x24] sm:$0xf]
    %v236 = vld [vmem:[%s3 + $0x28] sm:$0xf]
    %v237 = vld [vmem:[%s3 + $0x2c] sm:$0xf]
    %v238 = vld [vmem:[%s3 + $0x30] sm:$0xf]
    %v239 = vld [vmem:[%s3 + $0x34] sm:$0xf]
    %v240 = vld [vmem:[%s3 + $0x38] sm:$0xf]
    %v241 = vld [vmem:[%s3 + $0x3c] sm:$0xf]
    %v242 = vld [vmem:[%s4] sm:$0x1]
    %v244 = vlaneseq
    %v245 = vshrl.u32 %v244, 7
    %v246 = vsub.s32 0, %v245
    %v247 = vrot.slane %v242, %v246
    %v265 = vunpack.c.l.b16 %v226
    %v266 = vunpack.c.l.b16 %v227
    %v267 = vunpack.c.l.b16 %v228
    %v268 = vunpack.c.l.b16 %v229
    %v269 = vunpack.c.l.b16 %v230
    %v270 = vunpack.c.l.b16 %v231
    %v271 = vunpack.c.l.b16 %v232
    %v272 = vunpack.c.l.b16 %v233
    %v273 = vunpack.c.l.b16 %v234
    %v274 = vunpack.c.l.b16 %v235
    %v275 = vunpack.c.l.b16 %v236
    %v276 = vunpack.c.l.b16 %v237
    %v277 = vunpack.c.l.b16 %v238
    %v278 = vunpack.c.l.b16 %v239
    %v279 = vunpack.c.l.b16 %v240
    %v280 = vunpack.c.l.b16 %v241
    %v281 = vpack.c.b16 %v266, %v265
    %v282 = vpack.c.b16 %v268, %v267
    %v283 = vpack.c.b16 %v270, %v269
    %v284 = vpack.c.b16 %v272, %v271
    %v285 = vpack.c.b16 %v274, %v273
    %v286 = vpack.c.b16 %v276, %v275
    %v287 = vpack.c.b16 %v278, %v277
    %v288 = vpack.c.b16 %v280, %v279
    %297 = vmatprep.subr.bf16.mxu0 0
    %298 = vmatpush1.bf16.msra.mxu0 %v281
    %299 = vmatprep.subr.bf16.mxu0 0
    %300 = vmatpush1.bf16.msra.mxu0 %v282
    %301 = vmatprep.subr.bf16.mxu0 0
    %302 = vmatpush1.bf16.msra.mxu0 %v283
    %303 = vmatprep.subr.bf16.mxu0 0
    %304 = vmatpush1.bf16.msra.mxu0 %v284
    %305 = vmatprep.subr.bf16.mxu0 0
    %306 = vmatpush1.bf16.msra.mxu0 %v285
    %307 = vmatprep.subr.bf16.mxu0 0
    %308 = vmatpush1.bf16.msra.mxu0 %v286
    %309 = vmatprep.subr.bf16.mxu0 0
    %310 = vmatpush1.bf16.msra.mxu0 %v287
    %311 = vmatprep.subr.bf16.mxu0 0
    %312 = vmatpush1.bf16.msra.mxu0 %v288
    %313 = vmatprep.subr.bf16.mxu0 0
    %314 = vmatpush1.bf16.msra.mxu0 0
    %315 = vmatprep.subr.bf16.mxu0 0
    %316 = vmatpush1.bf16.msra.mxu0 0
    %317 = vmatprep.subr.bf16.mxu0 0
    %318 = vmatpush1.bf16.msra.mxu0 0
    %319 = vmatprep.subr.bf16.mxu0 0
    %320 = vmatpush1.bf16.msra.mxu0 0
    %321 = vmatprep.subr.bf16.mxu0 0
    %322 = vmatpush1.bf16.msra.mxu0 0
    %323 = vmatprep.subr.bf16.mxu0 0
    %324 = vmatpush1.bf16.msra.mxu0 0
    %325 = vmatprep.subr.bf16.mxu0 0
    %326 = vmatpush1.bf16.msra.mxu0 0
    %327 = vmatprep.subr.bf16.mxu0 0
    %328 = vmatpush1.bf16.msra.mxu0 0
    %329 = vmatprep.mubr.bf16.mxu0 0
    %330 = vmatmul.mubr.bf16.gmra.mrb[0].mxu0 %v225
    %v331 = vpop.f32.mrb[0].mxu0
    %v332 = vadd.f32 %v247, %v331
    %v333 = vpop.f32.mrb[0].mxu0
    %v334 = vpop.f32.mrb[0].mxu0
    %v335 = vadd.f32 %v247, %v334
    %v336 = vpop.f32.mrb[0].mxu0
    %337 = vdwg.mxu0
    %vm338 = vcmask 15360
    %339 = vst.msk [vmem:[%s5] sm:$0xff] %vm338, %v332
    %340 = vst.msk [vmem:[%s5 + $0x8] sm:$0xff] %vm338, %v335
    // Predicated region
    $region26: #{tpu_custom_call.1} parent=1 // pred_check
      _
    $region27: #{tpu_custom_call.1} parent=1 // pred_check_branch
      %342 = sbr.rel (0) target = $region29
    $region28: #{tpu_custom_call.1} parent=1 // pred_region
      _
    $region29: #{tpu_custom_call.1} parent=1 // pred_fallthru
      _
    // Predicated region
    $region30: #{tpu_custom_call.1} parent=1 // pred_check
      _
    $region31: #{tpu_custom_call.1} parent=1 // pred_check_branch
      %344 = sbr.rel (0) target = $region33
    $region32: #{tpu_custom_call.1} parent=1 // pred_region
      _
    $region33: #{tpu_custom_call.1} parent=1 // pred_fallthru
      _
    %345 = vsyncpa [#allocation3], 1

</llo_original>
